<compile_context>
chip_gen: v7x
topology: tpu7x:2x2x1
jax: 0.10.0
libtpu: 0.0.40
codegen_flags: <defaults>
</compile_context>

<pallas_src>
from typing import NamedTuple, List, Tuple, Dict, Any

import numpy as np

import jax
import jax.numpy as jnp
from jax.experimental import pallas as pl
from jax.experimental.pallas import tpu as pltpu


# --------------------------------------------------------------------------
# "parameters" of the wrapped transform (GeneralizedRCNNTransform defaults)
# --------------------------------------------------------------------------
IMAGE_MEAN = (0.485, 0.456, 0.406)
IMAGE_STD = (0.229, 0.224, 0.225)
SIZE_DIVISIBLE = 32      # torchvision GeneralizedRCNNTransform default
_LANE = 128              # lane-dense padded width (last dim multiple of 128)
_TH_UNIT = 32            # row-tile granularity (multiple of 8 sublanes & /32)


def _round_up(v: int, d: int) -> int:
    return ((v + d - 1) // d) * d


def _cdiv(a: int, b: int) -> int:
    return -(-a // b)


def _tpu_vmem_capacity_bytes() -> int:
    """Physical VMEM per core (generation-aware); conservative fallback."""
    try:
        cap = int(pltpu.get_tpu_info().vmem_capacity_bytes)
        if cap > 0:
            return cap
    except Exception:
        pass
    return 64 << 20  # v7x physical size; safe lower bound everywhere


def _choose_tiling(max_h: int, w_pad: int, c: int,
                   in_bytes: int, out_bytes: int,
                   budget_bytes: int, n_images: int) -> Tuple[int, int, int]:
    """Pick the row-tile height TH (multiple of 32) purely from the VMEM
    budget (no divisor constraint), balance the H tiles, and return
    (TH, n_tiles, H_pad = TH * n_tiles)."""
    h_aligned = _round_up(max(int(max_h), 1), _TH_UNIT)
    # double-buffered input block + double-buffered output block, per row
    per_row = 2 * c * w_pad * (in_bytes + out_bytes)
    max_rows = max(_TH_UNIT, (budget_bytes // per_row) // _TH_UNIT * _TH_UNIT)
    n_tiles = _cdiv(h_aligned, max_rows)
    # v7x megacore: keep >= 2 grid programs even for a single-image batch
    if n_images == 1 and n_tiles == 1 and h_aligned >= 2 * _TH_UNIT:
        n_tiles = 2
    th = _round_up(_cdiv(h_aligned, n_tiles), _TH_UNIT)
    return th, n_tiles, th * n_tiles


# --------------------------------------------------------------------------
# Pallas kernel: fused normalize + pad-mask over the whole batch
#   grid  = (image n, H-tile t)
#   block = (1, C, TH, W_pad)  -- lane-dense last dim (padded width, /128)
# --------------------------------------------------------------------------
def _norm_pad_kernel(h_ref, w_ref, scale_ref, bias_ref, x_ref, o_ref):
    n = pl.program_id(0)            # image index
    t = pl.program_id(1)            # row-tile index
    _, C, TH, WP = x_ref.shape
    h = h_ref[n]                    # original image height (SMEM scalar)
    w = w_ref[n]                    # original image width  (SMEM scalar)
    row0 = t * TH

    # Tile entirely inside the valid image region -> no masking needed.
    interior = jnp.logical_and(row0 + TH <= h, w >= WP)

    @pl.when(interior)
    def _():
        for c in range(C):
            xc = x_ref[0, c, :, :].astype(jnp.float32)
            o_ref[0, c, :, :] = (xc * scale_ref[c] + bias_ref[c]).astype(o_ref.dtype)

    @pl.when(jnp.logical_not(interior))
    def _():
        # Valid-region mask is channel independent: build it ONCE per block.
        rows = jax.lax.broadcasted_iota(jnp.int32, (TH, WP), 0) + row0
        cols = jax.lax.broadcasted_iota(jnp.int32, (TH, WP), 1)
        valid = jnp.logical_and(rows < h, cols < w)
        for c in range(C):
            xc = x_ref[0, c, :, :].astype(jnp.float32)
            yc = xc * scale_ref[c] + bias_ref[c]
            o_ref[0, c, :, :] = jnp.where(valid, yc, 0.0).astype(o_ref.dtype)


def normalize_pad_batch(x: jnp.ndarray,
                        heights: jnp.ndarray,
                        widths: jnp.ndarray,
                        scale: jnp.ndarray,
                        bias: jnp.ndarray,
                        th: int,
                        out_dtype=jnp.float32) -> jnp.ndarray:
    """x: (N, C, H_pad, W_pad), any real dtype (uint8 or float32).
    Returns (N, C, H_pad, W_pad) `out_dtype`: x*scale[c] + bias[c] inside each
    image's (h, w) region, exact zeros in the padding."""
    n, c, hp, wp = x.shape
    assert hp % th == 0 and wp % _LANE == 0

    blk = (1, c, th, wp)
    cap = _tpu_vmem_capacity_bytes()
    blk_bytes = c * th * wp * (jnp.dtype(x.dtype).itemsize
                               + jnp.dtype(out_dtype).itemsize)
    # explicit, generation-aware limit: actual double-buffered footprint + margin
    vmem_limit = int(min(cap - (2 << 20), 2 * blk_bytes + (4 << 20)))
    vmem_limit = max(vmem_limit, 16 << 20)

    return pl.pallas_call(
        _norm_pad_kernel,
        out_shape=jax.ShapeDtypeStruct((n, c, hp, wp), out_dtype),
        grid=(n, hp // th),
        in_specs=[
            pl.BlockSpec(memory_space=pltpu.MemorySpace.SMEM),   # heights (N,)
            pl.BlockSpec(memory_space=pltpu.MemorySpace.SMEM),   # widths  (N,)
            pl.BlockSpec(memory_space=pltpu.MemorySpace.SMEM),   # scale   (C,)
            pl.BlockSpec(memory_space=pltpu.MemorySpace.SMEM),   # bias    (C,)
            pl.BlockSpec(blk, lambda i, t: (i, 0, t, 0)),        # image block
        ],
        out_specs=pl.BlockSpec(blk, lambda i, t: (i, 0, t, 0)),
        compiler_params=pltpu.CompilerParams(
            dimension_semantics=("parallel", "parallel"),
            vmem_limit_bytes=vmem_limit,
        ),
    )(heights, widths, scale, bias, x)


# --------------------------------------------------------------------------
# Glue: the torchvision-style "transform" (normalize -> pad -> batch)
# --------------------------------------------------------------------------
class ImageList(NamedTuple):
    tensors: jnp.ndarray                  # (N, C, H_pad, W_pad)
    image_sizes: List[Tuple[int, int]]    # original (H, W) per image


def rcnn_transform(images: List[jnp.ndarray],
                   targets: List[Dict[str, Any]],
                   out_dtype=jnp.float32):
    """Normalize + pad + batch with one fused Pallas kernel pass on device."""
    image_sizes = [(int(img.shape[1]), int(img.shape[2])) for img in images]
    c = int(images[0].shape[0])
    max_h = max(h for h, _ in image_sizes)
    max_w = max(w for _, w in image_sizes)
    # lane-dense width: multiple of 128 (also satisfies SIZE_DIVISIBLE)
    w_pad = _round_up(_round_up(max_w, SIZE_DIVISIBLE), _LANE)

    # Ragged pad/stack happens on HOST (numpy): no extra device HBM pass.
    np_imgs = [np.asarray(img) for img in images]
    in_dtype = np_imgs[0].dtype

    budget = min(20 << 20, _tpu_vmem_capacity_bytes() // 3)
    th, _, h_pad = _choose_tiling(max_h, w_pad, c,
                                  np.dtype(in_dtype).itemsize,
                                  np.dtype(out_dtype).itemsize,
                                  budget, len(images))

    stacked_np = np.zeros((len(images), c, h_pad, w_pad), dtype=in_dtype)
    for i, a in enumerate(np_imgs):
        stacked_np[i, :, :a.shape[1], :a.shape[2]] = a
    stacked = jnp.asarray(stacked_np)                       # single device_put

    mean = jnp.asarray(IMAGE_MEAN, dtype=jnp.float32)
    std = jnp.asarray(IMAGE_STD, dtype=jnp.float32)
    if np.issubdtype(in_dtype, np.integer):
        scale = 1.0 / (255.0 * std)      # fold ToTensor's 1/255 for uint8 input
    else:
        scale = 1.0 / std
    bias = -mean / std
    heights = jnp.asarray([h for h, _ in image_sizes], dtype=jnp.int32)
    widths = jnp.asarray([w for _, w in image_sizes], dtype=jnp.int32)

    batched = normalize_pad_batch(stacked, heights, widths, scale, bias, th,
                                  out_dtype=out_dtype)

    # TODO(synk): GeneralizedRCNNTransform also bilinearly resizes images and
    # rescales target boxes; resize is left out here (targets pass through).
    return ImageList(batched, image_sizes), targets


# --------------------------------------------------------------------------
# LoggingTransform.forward equivalent
# --------------------------------------------------------------------------
def logging_transform_forward(images: List[jnp.ndarray],
                              targets: List[Dict[str, Any]]):
    def pretty_targets(t):
        return {k: (tuple(v.shape) if hasattr(v, "shape") else v) for k, v in t.items()}

    print(f"Before: {[tuple(i.shape) for i in images]}, "
          f"{[pretty_targets(t) for t in targets]}")

    images_out, targets_out = rcnn_transform(images, targets)

    # TODO(synk): original module calls utils.show(t) to visualize each image;
    # no Pallas/JAX equivalent for host-side image display.

    print(f"After: {tuple(images_out.tensors.shape)} w/ {images_out.image_sizes}, "
          f"{[pretty_targets(t) for t in targets_out]}")
    return images_out, targets_out


# --------------------------------------------------------------------------
# Demo / smoke test
# --------------------------------------------------------------------------
if __name__ == "__main__":
    key = jax.random.PRNGKey(0)
    k0, k1, kb0, kb1, k2 = jax.random.split(key, 5)

    # two small NCHW images of different spatial sizes (like a detection batch)
    img0 = jax.random.uniform(k0, (3, 16, 16), dtype=jnp.float32)
    img1 = jax.random.uniform(k1, (3, 12, 14), dtype=jnp.float32)
    images = [img0, img1]

    targets = [
        {"boxes": jax.random.uniform(kb0, (2, 4), dtype=jnp.float32) * 16.0,
         "labels": jnp.array([1, 2], dtype=jnp.int32)},
        {"boxes": jax.random.uniform(kb1, (3, 4), dtype=jnp.float32) * 12.0,
         "labels": jnp.array([3, 1, 2], dtype=jnp.int32)},
    ]

    image_list, targets_out = logging_transform_forward(images, targets)
    jax.block_until_ready(image_list.tensors)

    # numerical check of the fused Pallas normalize+pad against plain JAX
    mean = jnp.asarray(IMAGE_MEAN, dtype=jnp.float32).reshape(3, 1, 1)
    std = jnp.asarray(IMAGE_STD, dtype=jnp.float32).reshape(3, 1, 1)

    n, c, hp, wp = image_list.tensors.shape
    assert (n, c) == (2, 3), "bad batch/channel shape"
    assert hp % SIZE_DIVISIBLE == 0 and wp % _LANE == 0, "bad padded shape"

    ref0 = (img0 - mean) / std
    got0 = image_list.tensors[0, :, :16, :16]
    assert jnp.allclose(got0, ref0, atol=1e-5), "normalization mismatch (img0)"

    ref1 = (img1 - mean) / std
    got1 = image_list.tensors[1, :, :12, :14]
    assert jnp.allclose(got1, ref1, atol=1e-5), "normalization mismatch (img1)"

    # padded region of the batched tensor must be exact zeros
    assert jnp.all(image_list.tensors[0, :, 16:, :] == 0.0), "pad rows not zero (img0)"
    assert jnp.all(image_list.tensors[0, :, :, 16:] == 0.0), "pad cols not zero (img0)"
    assert jnp.all(image_list.tensors[1, :, 12:, :] == 0.0), "pad rows not zero (img1)"
    assert jnp.all(image_list.tensors[1, :, :, 14:] == 0.0), "pad cols not zero (img1)"

    # uint8 input path (1/255 folded into scale) on a single-image batch
    img_u8 = (jax.random.uniform(k2, (3, 20, 18)) * 255.0).astype(jnp.uint8)
    il_u8, _ = rcnn_transform([img_u8], [{}])
    jax.block_until_ready(il_u8.tensors)
    ref_u8 = (img_u8.astype(jnp.float32) / 255.0 - mean) / std
    got_u8 = il_u8.tensors[0, :, :20, :18]
    assert jnp.allclose(got_u8, ref_u8, atol=1e-5), "normalization mismatch (uint8)"
    assert jnp.all(il_u8.tensors[0, :, 20:, :] == 0.0), "pad rows not zero (uint8)"
    assert jnp.all(il_u8.tensors[0, :, :, 18:] == 0.0), "pad cols not zero (uint8)"

    print("KERNEL_OK")
</pallas_src>

<mosaic_0001>
module attributes {stable_mosaic.version = 11 : i64} {
  func.func @_norm_pad_kernel(%arg0: i32, %arg1: i32, %arg2: memref<2xi32, #tpu.memory_space<smem>>, %arg3: memref<2xi32, #tpu.memory_space<smem>>, %arg4: memref<3xf32, #tpu.memory_space<smem>>, %arg5: memref<3xf32, #tpu.memory_space<smem>>, %arg6: memref<1x3x32x128xf32, #tpu.memory_space<vmem>>, %arg7: memref<1x3x32x128xf32, #tpu.memory_space<vmem>>) attributes {dimension_semantics = [#tpu.dimension_semantics<parallel>, #tpu.dimension_semantics<parallel>], iteration_bounds = array<i64: 2, 1>, scalar_prefetch = 0 : i64, scratch_operands = 0 : i64, tpu.core_type = #tpu.core_type<tc>, window_params = [{transform_indices = @transform_0, window_bounds = array<i64: 2>}, {transform_indices = @transform_1, window_bounds = array<i64: 2>}, {transform_indices = @transform_2, window_bounds = array<i64: 3>}, {transform_indices = @transform_3, window_bounds = array<i64: 3>}, {transform_indices = @transform_4, window_bounds = array<i64: 1, 3, 32, 128>}, {transform_indices = @transform_5, window_bounds = array<i64: 1, 3, 32, 128>}]} {
    %0 = arith.index_cast %arg0 : i32 to index
    %1 = memref.load %arg2[%0] : memref<2xi32, #tpu.memory_space<smem>>
    %2 = arith.index_cast %arg0 : i32 to index
    %3 = memref.load %arg3[%2] : memref<2xi32, #tpu.memory_space<smem>>
    %c32_i32 = arith.constant 32 : i32
    %4 = arith.muli %arg1, %c32_i32 : i32
    %c32_i32_0 = arith.constant 32 : i32
    %5 = arith.addi %4, %c32_i32_0 : i32
    %6 = arith.cmpi sle, %5, %1 : i32
    %c128_i32 = arith.constant 128 : i32
    %7 = arith.cmpi sge, %3, %c128_i32 : i32
    %8 = arith.andi %6, %7 : i1
    %9 = arith.extui %8 : i1 to i32
    %c0_i32 = arith.constant 0 : i32
    %10 = arith.cmpi ne, %9, %c0_i32 : i32
    scf.if %10 {
      %c0 = arith.constant 0 : index
      %c0_2 = arith.constant 0 : index
      %c0_3 = arith.constant 0 : index
      %c0_4 = arith.constant 0 : index
      %14 = vector.load %arg6[%c0, %c0_2, %c0_3, %c0_4] : memref<1x3x32x128xf32, #tpu.memory_space<vmem>>, vector<1x1x32x128xf32>
      %15 = vector.shape_cast %14 : vector<1x1x32x128xf32> to vector<32x128xf32>
      %c0_5 = arith.constant 0 : index
      %16 = memref.load %arg4[%c0_5] : memref<3xf32, #tpu.memory_space<smem>>
      %17 = vector.broadcast %16 : f32 to vector<32x128xf32>
      %18 = arith.mulf %15, %17 : vector<32x128xf32>
      %c0_6 = arith.constant 0 : index
      %19 = memref.load %arg5[%c0_6] : memref<3xf32, #tpu.memory_space<smem>>
      %20 = vector.broadcast %19 : f32 to vector<32x128xf32>
      %21 = arith.addf %18, %20 : vector<32x128xf32>
      %c0_7 = arith.constant 0 : index
      %c0_8 = arith.constant 0 : index
      %c0_9 = arith.constant 0 : index
      %c0_10 = arith.constant 0 : index
      %22 = vector.load %arg7[%c0_7, %c0_8, %c0_9, %c0_10] : memref<1x3x32x128xf32, #tpu.memory_space<vmem>>, vector<1x1x32x128xf32>
      %23 = vector.shape_cast %22 : vector<1x1x32x128xf32> to vector<32x128xf32>
      %24 = vector.shape_cast %21 : vector<32x128xf32> to vector<1x1x32x128xf32>
      tpu.vector_store %arg7[%c0_7, %c0_8, %c0_9, %c0_10], %24 {strides = array<i32>} : memref<1x3x32x128xf32, #tpu.memory_space<vmem>>, vector<1x1x32x128xf32>,
      %c0_11 = arith.constant 0 : index
      %c1 = arith.constant 1 : index
      %c0_12 = arith.constant 0 : index
      %c0_13 = arith.constant 0 : index
      %25 = vector.load %arg6[%c0_11, %c1, %c0_12, %c0_13] : memref<1x3x32x128xf32, #tpu.memory_space<vmem>>, vector<1x1x32x128xf32>
      %26 = vector.shape_cast %25 : vector<1x1x32x128xf32> to vector<32x128xf32>
      %c1_14 = arith.constant 1 : index
      %27 = memref.load %arg4[%c1_14] : memref<3xf32, #tpu.memory_space<smem>>
      %28 = vector.broadcast %27 : f32 to vector<32x128xf32>
      %29 = arith.mulf %26, %28 : vector<32x128xf32>
      %c1_15 = arith.constant 1 : index
      %30 = memref.load %arg5[%c1_15] : memref<3xf32, #tpu.memory_space<smem>>
      %31 = vector.broadcast %30 : f32 to vector<32x128xf32>
      %32 = arith.addf %29, %31 : vector<32x128xf32>
      %c0_16 = arith.constant 0 : index
      %c1_17 = arith.constant 1 : index
      %c0_18 = arith.constant 0 : index
      %c0_19 = arith.constant 0 : index
      %33 = vector.load %arg7[%c0_16, %c1_17, %c0_18, %c0_19] : memref<1x3x32x128xf32, #tpu.memory_space<vmem>>, vector<1x1x32x128xf32>
      %34 = vector.shape_cast %33 : vector<1x1x32x128xf32> to vector<32x128xf32>
      %35 = vector.shape_cast %32 : vector<32x128xf32> to vector<1x1x32x128xf32>
      tpu.vector_store %arg7[%c0_16, %c1_17, %c0_18, %c0_19], %35 {strides = array<i32>} : memref<1x3x32x128xf32, #tpu.memory_space<vmem>>, vector<1x1x32x128xf32>,
      %c0_20 = arith.constant 0 : index
      %c2 = arith.constant 2 : index
      %c0_21 = arith.constant 0 : index
      %c0_22 = arith.constant 0 : index
      %36 = vector.load %arg6[%c0_20, %c2, %c0_21, %c0_22] : memref<1x3x32x128xf32, #tpu.memory_space<vmem>>, vector<1x1x32x128xf32>
      %37 = vector.shape_cast %36 : vector<1x1x32x128xf32> to vector<32x128xf32>
      %c2_23 = arith.constant 2 : index
      %38 = memref.load %arg4[%c2_23] : memref<3xf32, #tpu.memory_space<smem>>
      %39 = vector.broadcast %38 : f32 to vector<32x128xf32>
      %40 = arith.mulf %37, %39 : vector<32x128xf32>
      %c2_24 = arith.constant 2 : index
      %41 = memref.load %arg5[%c2_24] : memref<3xf32, #tpu.memory_space<smem>>
      %42 = vector.broadcast %41 : f32 to vector<32x128xf32>
      %43 = arith.addf %40, %42 : vector<32x128xf32>
      %c0_25 = arith.constant 0 : index
      %c2_26 = arith.constant 2 : index
      %c0_27 = arith.constant 0 : index
      %c0_28 = arith.constant 0 : index
      %44 = vector.load %arg7[%c0_25, %c2_26, %c0_27, %c0_28] : memref<1x3x32x128xf32, #tpu.memory_space<vmem>>, vector<1x1x32x128xf32>
      %45 = vector.shape_cast %44 : vector<1x1x32x128xf32> to vector<32x128xf32>
      %46 = vector.shape_cast %43 : vector<32x128xf32> to vector<1x1x32x128xf32>
      tpu.vector_store %arg7[%c0_25, %c2_26, %c0_27, %c0_28], %46 {strides = array<i32>} : memref<1x3x32x128xf32, #tpu.memory_space<vmem>>, vector<1x1x32x128xf32>,
    } else {
    }
    %true = arith.constant true
    %11 = arith.xori %8, %true : i1
    %12 = arith.extui %11 : i1 to i32
    %c0_i32_1 = arith.constant 0 : i32
    %13 = arith.cmpi ne, %12, %c0_i32_1 : i32
    scf.if %13 {
      %14 = tpu.iota {dimensions = array<i32: 0>} : vector<32x128xi32>
      %15 = vector.broadcast %4 : i32 to vector<32x128xi32>
      %16 = arith.addi %14, %15 : vector<32x128xi32>
      %17 = tpu.iota {dimensions = array<i32: 1>} : vector<32x128xi32>
      %18 = vector.broadcast %1 : i32 to vector<32x128xi32>
      %19 = arith.cmpi slt, %16, %18 : vector<32x128xi32>
      %20 = vector.broadcast %3 : i32 to vector<32x128xi32>
      %21 = arith.cmpi slt, %17, %20 : vector<32x128xi32>
      %22 = arith.andi %19, %21 : vector<32x128xi1>
      %c0 = arith.constant 0 : index
      %c0_2 = arith.constant 0 : index
      %c0_3 = arith.constant 0 : index
      %c0_4 = arith.constant 0 : index
      %23 = vector.load %arg6[%c0, %c0_2, %c0_3, %c0_4] : memref<1x3x32x128xf32, #tpu.memory_space<vmem>>, vector<1x1x32x128xf32>
      %24 = vector.shape_cast %23 : vector<1x1x32x128xf32> to vector<32x128xf32>
      %c0_5 = arith.constant 0 : index
      %25 = memref.load %arg4[%c0_5] : memref<3xf32, #tpu.memory_space<smem>>
      %26 = vector.broadcast %25 : f32 to vector<32x128xf32>
      %27 = arith.mulf %24, %26 : vector<32x128xf32>
      %c0_6 = arith.constant 0 : index
      %28 = memref.load %arg5[%c0_6] : memref<3xf32, #tpu.memory_space<smem>>
      %29 = vector.broadcast %28 : f32 to vector<32x128xf32>
      %30 = arith.addf %27, %29 : vector<32x128xf32>
      %cst = arith.constant 0.000000e+00 : f32
      %31 = vector.broadcast %cst : f32 to vector<32x128xf32>
      %32 = arith.select %22, %30, %31 : vector<32x128xi1>, vector<32x128xf32>
      %c0_7 = arith.constant 0 : index
      %c0_8 = arith.constant 0 : index
      %c0_9 = arith.constant 0 : index
      %c0_10 = arith.constant 0 : index
      %33 = vector.load %arg7[%c0_7, %c0_8, %c0_9, %c0_10] : memref<1x3x32x128xf32, #tpu.memory_space<vmem>>, vector<1x1x32x128xf32>
      %34 = vector.shape_cast %33 : vector<1x1x32x128xf32> to vector<32x128xf32>
      %35 = vector.shape_cast %32 : vector<32x128xf32> to vector<1x1x32x128xf32>
      tpu.vector_store %arg7[%c0_7, %c0_8, %c0_9, %c0_10], %35 {strides = array<i32>} : memref<1x3x32x128xf32, #tpu.memory_space<vmem>>, vector<1x1x32x128xf32>,
      %c0_11 = arith.constant 0 : index
      %c1 = arith.constant 1 : index
      %c0_12 = arith.constant 0 : index
      %c0_13 = arith.constant 0 : index
      %36 = vector.load %arg6[%c0_11, %c1, %c0_12, %c0_13] : memref<1x3x32x128xf32, #tpu.memory_space<vmem>>, vector<1x1x32x128xf32>
      %37 = vector.shape_cast %36 : vector<1x1x32x128xf32> to vector<32x128xf32>
      %c1_14 = arith.constant 1 : index
      %38 = memref.load %arg4[%c1_14] : memref<3xf32, #tpu.memory_space<smem>>
      %39 = vector.broadcast %38 : f32 to vector<32x128xf32>
      %40 = arith.mulf %37, %39 : vector<32x128xf32>
      %c1_15 = arith.constant 1 : index
      %41 = memref.load %arg5[%c1_15] : memref<3xf32, #tpu.memory_space<smem>>
      %42 = vector.broadcast %41 : f32 to vector<32x128xf32>
      %43 = arith.addf %40, %42 : vector<32x128xf32>
      %cst_16 = arith.constant 0.000000e+00 : f32
      %44 = vector.broadcast %cst_16 : f32 to vector<32x128xf32>
      %45 = arith.select %22, %43, %44 : vector<32x128xi1>, vector<32x128xf32>
      %c0_17 = arith.constant 0 : index
      %c1_18 = arith.constant 1 : index
      %c0_19 = arith.constant 0 : index
      %c0_20 = arith.constant 0 : index
      %46 = vector.load %arg7[%c0_17, %c1_18, %c0_19, %c0_20] : memref<1x3x32x128xf32, #tpu.memory_space<vmem>>, vector<1x1x32x128xf32>
      %47 = vector.shape_cast %46 : vector<1x1x32x128xf32> to vector<32x128xf32>
      %48 = vector.shape_cast %45 : vector<32x128xf32> to vector<1x1x32x128xf32>
      tpu.vector_store %arg7[%c0_17, %c1_18, %c0_19, %c0_20], %48 {strides = array<i32>} : memref<1x3x32x128xf32, #tpu.memory_space<vmem>>, vector<1x1x32x128xf32>,
      %c0_21 = arith.constant 0 : index
      %c2 = arith.constant 2 : index
      %c0_22 = arith.constant 0 : index
      %c0_23 = arith.constant 0 : index
      %49 = vector.load %arg6[%c0_21, %c2, %c0_22, %c0_23] : memref<1x3x32x128xf32, #tpu.memory_space<vmem>>, vector<1x1x32x128xf32>
      %50 = vector.shape_cast %49 : vector<1x1x32x128xf32> to vector<32x128xf32>
      %c2_24 = arith.constant 2 : index
      %51 = memref.load %arg4[%c2_24] : memref<3xf32, #tpu.memory_space<smem>>
      %52 = vector.broadcast %51 : f32 to vector<32x128xf32>
      %53 = arith.mulf %50, %52 : vector<32x128xf32>
      %c2_25 = arith.constant 2 : index
      %54 = memref.load %arg5[%c2_25] : memref<3xf32, #tpu.memory_space<smem>>
      %55 = vector.broadcast %54 : f32 to vector<32x128xf32>
      %56 = arith.addf %53, %55 : vector<32x128xf32>
      %cst_26 = arith.constant 0.000000e+00 : f32
      %57 = vector.broadcast %cst_26 : f32 to vector<32x128xf32>
      %58 = arith.select %22, %56, %57 : vector<32x128xi1>, vector<32x128xf32>
      %c0_27 = arith.constant 0 : index
      %c2_28 = arith.constant 2 : index
      %c0_29 = arith.constant 0 : index
      %c0_30 = arith.constant 0 : index
      %59 = vector.load %arg7[%c0_27, %c2_28, %c0_29, %c0_30] : memref<1x3x32x128xf32, #tpu.memory_space<vmem>>, vector<1x1x32x128xf32>
      %60 = vector.shape_cast %59 : vector<1x1x32x128xf32> to vector<32x128xf32>
      %61 = vector.shape_cast %58 : vector<32x128xf32> to vector<1x1x32x128xf32>
      tpu.vector_store %arg7[%c0_27, %c2_28, %c0_29, %c0_30], %61 {strides = array<i32>} : memref<1x3x32x128xf32, #tpu.memory_space<vmem>>, vector<1x1x32x128xf32>,
    } else {
    }
    return
  }
  func.func @transform_0(%arg0: i32, %arg1: i32) -> i32 {
    %c0_i32 = arith.constant 0 : i32
    %c0_i32_0 = arith.constant 0 : i32
    return %c0_i32 : i32
  }
  func.func @transform_1(%arg0: i32, %arg1: i32) -> i32 {
    %c0_i32 = arith.constant 0 : i32
    %c0_i32_0 = arith.constant 0 : i32
    return %c0_i32 : i32
  }
  func.func @transform_2(%arg0: i32, %arg1: i32) -> i32 {
    %c0_i32 = arith.constant 0 : i32
    %c0_i32_0 = arith.constant 0 : i32
    return %c0_i32 : i32
  }
  func.func @transform_3(%arg0: i32, %arg1: i32) -> i32 {
    %c0_i32 = arith.constant 0 : i32
    %c0_i32_0 = arith.constant 0 : i32
    return %c0_i32 : i32
  }
  func.func @transform_4(%arg0: i32, %arg1: i32) -> (i32, i32, i32, i32) {
    %c0_i32 = arith.constant 0 : i32
    %c0_i32_0 = arith.constant 0 : i32
    %c0_i32_1 = arith.constant 0 : i32
    return %arg0, %c0_i32, %arg1, %c0_i32_0 : i32, i32, i32, i32
  }
  func.func @transform_5(%arg0: i32, %arg1: i32) -> (i32, i32, i32, i32) {
    %c0_i32 = arith.constant 0 : i32
    %c0_i32_0 = arith.constant 0 : i32
    %c0_i32_1 = arith.constant 0 : i32
    return %arg0, %c0_i32, %arg1, %c0_i32_0 : i32, i32, i32, i32
  }
}

</mosaic_0001>

<llo_original>
// kernel: tpu_custom_call.1
$region0: #{tpu_custom_call.1}
  #allocation0 [shape = 'u32[]', space=smem, size = 0x4, offset = 0x4, fixed_abs, tag = 'smem constant byte address 0x4 - core index']
  #allocation1 [shape = 'u32[144,128]{1,0:T(1,128)}', space=vmem, size = 0x12000, scoped, tag = 'internal scratch']
  %s0 = inlined_call_operand.hbm [shape: s32[2], index: 0, kind: input, shape index: {}]
  %s1 = inlined_call_operand.vmem [shape: s32[2], index: 1, kind: input, shape index: {}]
  %s2 = inlined_call_operand.vmem [shape: f32[3], index: 2, kind: input, shape index: {}]
  %s3 = inlined_call_operand.vmem [shape: f32[3], index: 3, kind: input, shape index: {}]
  %s4 = inlined_call_operand.hbm [shape: f32[2,3,32,128], index: 4, kind: input, shape index: {}]
  %s5 = inlined_call_operand.hbm [shape: f32[2,3,32,128], index: 5, kind: output, shape index: {}]
  %s6 = sld [smem:[#allocation0]]
  $region81: #{tpu_custom_call.1} parent=0
    _
  %s8 = ssub.s32 1, %s6
  %s9 = scalar_select 0, %s8, %s6
  $region1: #{tpu_custom_call.1} parent=0
    #allocation2 [shape = 'u8[512]{0}', space=smem, size = 0x200, scoped, tag = 'input window, operand 0, single buffered']
    #allocation3 [shape = 's32[2]{0}', space=sflag, size = 0x8, scoped, tag = 'scoped memory for tpu_custom_call.1']
    #allocation4 [shape = 's32[2]{0}', space=sflag, size = 0x8, scoped, tag = 'scoped memory for tpu_custom_call.1']
    #allocation5 [shape = 's32[2]{0}', space=sflag, size = 0x8, scoped, tag = 'scoped memory for tpu_custom_call.1']
    #allocation6 [shape = 's32[2]{0}', space=sflag, size = 0x8, scoped, tag = 'scoped memory for tpu_custom_call.1']
    #allocation7 [shape = 'u8[512]{0}', space=smem, size = 0x200, scoped, tag = 'input window, operand 1, single buffered']
    #allocation8 [shape = 'u8[512]{0}', space=smem, size = 0x200, scoped, tag = 'input window, operand 2, single buffered']
    #allocation9 [shape = 's32[1]{0}', space=sflag, size = 0x4, scoped, tag = 'scoped memory for tpu_custom_call.1']
    #allocation10 [shape = 'u8[512]{0}', space=smem, size = 0x200, scoped, tag = 'input window, operand 3, single buffered']
    #allocation11 [shape = 'u8[98304]{0}', space=vmem, size = 0x18000, scoped, tag = 'input window, operand 4']
    #allocation12 [shape = 'u8[98304]{0}', space=vmem, size = 0x18000, scoped, tag = 'output window, operand 0']
    %10 = vsyncpa [#allocation5], 0
    %11 = vsyncpa [#allocation6], 0
    %12 = vsyncpa [#allocation9], 0
    %13 = vsyncpa [#allocation3], 0
    %s14 = scalar_lea.sflag [#allocation3], 1
    %15 = vsyncpa %s14, 0
    %16 = vsyncpa [#allocation4], 0
    %s17 = scalar_lea.sflag [#allocation4], 1
    %18 = vsyncpa %s17, 0
    loop: start=0, step=1, limit=4
    $region2: #{tpu_custom_call.1} parent=1 // loop_pre_header
      _
    $region3: #{tpu_custom_call.1} parent=1 // loop_header
      %s20 = sphi 0, %s24
      %p21 = scmp.ge.s32.totalorder %s20, 4
      %s27 = sphi 0, %s39
      %s28 = sphi 0, %s35
      %s29 = sphi 0, %s27
      %s30 = sphi 0, %s28
      %s31 = sphi 0, %s29
      %s32 = sphi 0, %s30
      %s40 = sphi 0, %s40
      %s42 = sphi 0, %s40
      %s43 = sphi 0, %s42
      %s57 = sphi 0, %s43
      %s61 = sphi 0, %s61
      %s63 = sphi 0, %s61
      %s64 = sphi 0, %s63
      %s78 = sphi 0, %s64
      %s82 = sphi 0, %s82
      %s84 = sphi 0, %s82
      %s85 = sphi 0, %s84
      %s99 = sphi 0, %s85
      %s103 = sphi 0, %s103
      %s105 = sphi 0, %s103
      %s106 = sphi 0, %s105
      %s120 = sphi 0, %s106
      %s128 = sphi 0, %s130
      %s131 = sphi 0, %s128
      %s132 = sphi 0, %s131
      %s148 = sphi 0, %s132
      %s156 = sphi 0, %s158
      %s159 = sphi 0, %s156
      %s160 = sphi 0, %s159
      %s176 = sphi 0, %s160
    $region4: #{tpu_custom_call.1} parent=1 // loop_header_branch
      %23 = sbr.rel (%p21) target = $region8
    $region5: #{tpu_custom_call.1} parent=1 // loop_body
      %s25 = ssub.s32 %s20, 1
      %s26 = ssub.s32 %s20, 2
      %s33 = sadd.s32 1, %s28
      %p34 = scmp.ge.s32.totalorder %s33, 1
      %s35 = scalar_select %p34, 0, %s33
      %s36 = sadd.s32 1, %s27
      %s37 = scalar_select %p34, %s36, %s27
      %p38 = scmp.ge.s32.totalorder %s37, 2
      %s39 = scalar_select %p38, 0, %s37
      %s41 = sadd.s32 %s40, 1
      %p44 = scmp.eq.s32.totalorder %s20, 1
      %p45 = scmp.ne.s32.totalorder %s40, %s42
      %p46 = scmp.eq.s32.totalorder %s20, 0
      %p47 = por %p45, %p46
      %p48 = scmp.ne.s32.totalorder %s40, %s42
      %p49 = scmp.eq.s32.totalorder %s25, 1
      %p50 = por %p48, %p49
      %p51 = scmp.ne.s32.totalorder %s42, %s43
      %p52 = scmp.eq.s32.totalorder %s25, 0
      %p53 = por %p51, %p52
      %p54 = scmp.ne.s32.totalorder %s42, %s43
      %p55 = scmp.eq.s32.totalorder %s26, 1
      %p56 = por %p54, %p55
      %p58 = scmp.ne.s32.totalorder %s43, %s57
      %p59 = scmp.eq.s32.totalorder %s26, 0
      %p60 = por %p58, %p59
      %s62 = sadd.s32 %s61, 1
      %p65 = scmp.eq.s32.totalorder %s20, 1
      %p66 = scmp.ne.s32.totalorder %s61, %s63
      %p67 = scmp.eq.s32.totalorder %s20, 0
      %p68 = por %p66, %p67
      %p69 = scmp.ne.s32.totalorder %s61, %s63
      %p70 = scmp.eq.s32.totalorder %s25, 1
      %p71 = por %p69, %p70
      %p72 = scmp.ne.s32.totalorder %s63, %s64
      %p73 = scmp.eq.s32.totalorder %s25, 0
      %p74 = por %p72, %p73
      %p75 = scmp.ne.s32.totalorder %s63, %s64
      %p76 = scmp.eq.s32.totalorder %s26, 1
      %p77 = por %p75, %p76
      %p79 = scmp.ne.s32.totalorder %s64, %s78
      %p80 = scmp.eq.s32.totalorder %s26, 0
      %p81 = por %p79, %p80
      %s83 = sadd.s32 %s82, 1
      %p86 = scmp.eq.s32.totalorder %s20, 1
      %p87 = scmp.ne.s32.totalorder %s82, %s84
      %p88 = scmp.eq.s32.totalorder %s20, 0
      %p89 = por %p87, %p88
      %p90 = scmp.ne.s32.totalorder %s82, %s84
      %p91 = scmp.eq.s32.totalorder %s25, 1
      %p92 = por %p90, %p91
      %p93 = scmp.ne.s32.totalorder %s84, %s85
      %p94 = scmp.eq.s32.totalorder %s25, 0
      %p95 = por %p93, %p94
      %p96 = scmp.ne.s32.totalorder %s84, %s85
      %p97 = scmp.eq.s32.totalorder %s26, 1
      %p98 = por %p96, %p97
      %p100 = scmp.ne.s32.totalorder %s85, %s99
      %p101 = scmp.eq.s32.totalorder %s26, 0
      %p102 = por %p100, %p101
      %s104 = sadd.s32 %s103, 1
      %p107 = scmp.eq.s32.totalorder %s20, 1
      %p108 = scmp.ne.s32.totalorder %s103, %s105
      %p109 = scmp.eq.s32.totalorder %s20, 0
      %p110 = por %p108, %p109
      %p111 = scmp.ne.s32.totalorder %s103, %s105
      %p112 = scmp.eq.s32.totalorder %s25, 1
      %p113 = por %p111, %p112
      %p114 = scmp.ne.s32.totalorder %s105, %s106
      %p115 = scmp.eq.s32.totalorder %s25, 0
      %p116 = por %p114, %p115
      %p117 = scmp.ne.s32.totalorder %s105, %s106
      %p118 = scmp.eq.s32.totalorder %s26, 1
      %p119 = por %p117, %p118
      %p121 = scmp.ne.s32.totalorder %s106, %s120
      %p122 = scmp.eq.s32.totalorder %s26, 0
      %p123 = por %p121, %p122
      %s124 = ssub.s32 %s27, %s39
      %s125 = ssub.s32 %s28, %s35
      %s126 = sor.u32 %s124, %s125
      %p127 = scmp.eq.s32.totalorder %s126, 0
      %s129 = sadd.s32 %s128, 1
      %s130 = scalar_select %p127, %s128, %s129
      %p133 = pneg %p127
      %p134 = scmp.eq.s32.totalorder %s20, 1
      %p135 = por %p133, %p134
      %p136 = scmp.ne.s32.totalorder %s128, %s131
      %p137 = scmp.eq.s32.totalorder %s20, 0
      %p138 = por %p136, %p137
      %p139 = scmp.ne.s32.totalorder %s128, %s131
      %p140 = scmp.eq.s32.totalorder %s25, 1
      %p141 = por %p139, %p140
      %p142 = scmp.ne.s32.totalorder %s131, %s132
      %p143 = scmp.eq.s32.totalorder %s25, 0
      %p144 = por %p142, %p143
      %p145 = scmp.ne.s32.totalorder %s131, %s132
      %p146 = scmp.eq.s32.totalorder %s26, 1
      %p147 = por %p145, %p146
      %p149 = scmp.ne.s32.totalorder %s132, %s148
      %p150 = scmp.eq.s32.totalorder %s26, 0
      %p151 = por %p149, %p150
      %s152 = ssub.s32 %s27, %s39
      %s153 = ssub.s32 %s28, %s35
      %s154 = sor.u32 %s152, %s153
      %p155 = scmp.eq.s32.totalorder %s154, 0
      %s157 = sadd.s32 %s156, 1
      %s158 = scalar_select %p155, %s156, %s157
      %p161 = pneg %p155
      %p162 = scmp.eq.s32.totalorder %s20, 1
      %p163 = por %p161, %p162
      %p164 = scmp.ne.s32.totalorder %s156, %s159
      %p165 = scmp.eq.s32.totalorder %s20, 0
      %p166 = por %p164, %p165
      %p167 = scmp.ne.s32.totalorder %s156, %s159
      %p168 = scmp.eq.s32.totalorder %s25, 1
      %p169 = por %p167, %p168
      %p170 = scmp.ne.s32.totalorder %s159, %s160
      %p171 = scmp.eq.s32.totalorder %s25, 0
      %p172 = por %p170, %p171
      %p173 = scmp.ne.s32.totalorder %s159, %s160
      %p174 = scmp.eq.s32.totalorder %s26, 1
      %p175 = por %p173, %p174
      %p177 = scmp.ne.s32.totalorder %s160, %s176
      %p178 = scmp.eq.s32.totalorder %s26, 0
      %p179 = por %p177, %p178
      %p180 = scmp.le.s32.totalorder 1, %s20
      %p181 = scmp.lt.s32.totalorder %s20, 3
      %p182 = pnand %p180, %p181
      %p183 = pneg %p182
      // Predicated region
      $region9: #{tpu_custom_call.1} parent=5 // pred_check
        _
      $region10: #{tpu_custom_call.1} parent=5 // pred_check_branch
        %185 = sbr.rel (%p182) target = $region12
      $region11: #{tpu_custom_call.1} parent=5 // pred_region
        %s186 = ssub.s32 %s20, 1
        // Predicated region
        $region13: #{tpu_custom_call.1} parent=11 // pred_check
          %p187 = pneg %p53
        $region14: #{tpu_custom_call.1} parent=11 // pred_check_branch
          %189 = sbr.rel (%p187) target = $region16
        $region15: #{tpu_custom_call.1} parent=11 // pred_region
          %s191 = ssub.s32 16, 16
          %192 = vsyncadd [#allocation5], %s191
          %195 = dma.hbm_to_smem %s0, 16, [#allocation2], [#allocation5]
        $region16: #{tpu_custom_call.1} parent=11 // pred_fallthru
          _
        // Predicated region
        $region17: #{tpu_custom_call.1} parent=11 // pred_check
          %p196 = pneg %p74
        $region18: #{tpu_custom_call.1} parent=11 // pred_check_branch
          %198 = sbr.rel (%p196) target = $region20
        $region19: #{tpu_custom_call.1} parent=11 // pred_region
          %s200 = ssub.s32 16, 16
          %201 = vsyncadd [#allocation6], %s200
          %s203 = sshll.u32 %s1, 4
          %s204 = int_to_ptr.vmem [resolvable:$true] %s203
          %206 = dma.vmem_to_smem %s204, 16, [#allocation7], [#allocation6]
        $region20: #{tpu_custom_call.1} parent=11 // pred_fallthru
          _
        // Predicated region
        $region21: #{tpu_custom_call.1} parent=11 // pred_check
          %p207 = pneg %p95
        $region22: #{tpu_custom_call.1} parent=11 // pred_check_branch
          %209 = sbr.rel (%p207) target = $region24
        $region23: #{tpu_custom_call.1} parent=11 // pred_region
          %s211 = ssub.s32 16, 16
          %212 = vsyncadd [#allocation9], %s211
          %s214 = sshll.u32 %s2, 4
          %s215 = int_to_ptr.vmem [resolvable:$true] %s214
          %217 = dma.vmem_to_smem %s215, 16, [#allocation8], [#allocation9]
        $region24: #{tpu_custom_call.1} parent=11 // pred_fallthru
          _
        // Predicated region
        $region25: #{tpu_custom_call.1} parent=11 // pred_check
          %p218 = pneg %p116
        $region26: #{tpu_custom_call.1} parent=11 // pred_check_branch
          %220 = sbr.rel (%p218) target = $region28
        $region27: #{tpu_custom_call.1} parent=11 // pred_region
          %s222 = ssub.s32 16, 16
          %223 = vsyncadd [#allocation9], %s222
          %s225 = sshll.u32 %s3, 4
          %s226 = int_to_ptr.vmem [resolvable:$true] %s225
          %228 = dma.vmem_to_smem %s226, 16, [#allocation10], [#allocation9]
        $region28: #{tpu_custom_call.1} parent=11 // pred_fallthru
          _
      $region12: #{tpu_custom_call.1} parent=5 // pred_fallthru
        _
      %p229 = scmp.lt.s32.totalorder %s20, 2
      // Predicated region
      $region29: #{tpu_custom_call.1} parent=5 // pred_check
        %p230 = pneg %p229
      $region30: #{tpu_custom_call.1} parent=5 // pred_check_branch
        %232 = sbr.rel (%p230) target = $region32
      $region31: #{tpu_custom_call.1} parent=5 // pred_region
        // Predicated region
        $region33: #{tpu_custom_call.1} parent=31 // pred_check
          %p233 = pneg %p138
        $region34: #{tpu_custom_call.1} parent=31 // pred_check_branch
          %235 = sbr.rel (%p233) target = $region36
        $region35: #{tpu_custom_call.1} parent=31 // pred_region
          %s236 = sand.u32 %s128, 1
          %s237 = scalar_lea.sflag [#allocation3], %s236
          %s238 = sand.u32 %s128, 1
          %s239 = smul.addr %s238, 96
          %s240 = scalar_lea.vmem [#allocation11], %s239
          %s241 = smul.u32 4, %s28
          %s243 = ssub.s32 1536, 1536
          %244 = vsyncadd %s237, %s243
          %s245 = smul.addr %s27, 12
          %s246 = sadd.s32 %s241, %s245
          %s247 = smul.addr %s246, 128
          %s248 = scalar_lea.hbm %s4, %s247
          %s249 = sshll.u32 %s240, 4
          %s250 = int_to_ptr.vmem [resolvable:$true] %s249
          %255 = dma.hbm_to_vmem [thread:$0]  %s248, 1536, %s250, %s237, 128, 128, 8
        $region36: #{tpu_custom_call.1} parent=31 // pred_fallthru
          _
      $region32: #{tpu_custom_call.1} parent=5 // pred_fallthru
        _
      %p256 = scmp.le.s32.totalorder 1, %s20
      %p257 = scmp.lt.s32.totalorder %s20, 3
      %p258 = pnand %p256, %p257
      %p259 = pneg %p258
      // Predicated region
      $region37: #{tpu_custom_call.1} parent=5 // pred_check
        _
      $region38: #{tpu_custom_call.1} parent=5 // pred_check_branch
        %261 = sbr.rel (%p258) target = $region40
      $region39: #{tpu_custom_call.1} parent=5 // pred_region
        %s262 = ssub.s32 %s20, 1
        // Predicated region
        $region41: #{tpu_custom_call.1} parent=39 // pred_check
          %p263 = pneg %p53
        $region42: #{tpu_custom_call.1} parent=39 // pred_check_branch
          %265 = sbr.rel (%p263) target = $region44
        $region43: #{tpu_custom_call.1} parent=39 // pred_region
          %266 = dma.done [#allocation5], 16
        $region44: #{tpu_custom_call.1} parent=39 // pred_fallthru
          _
        // Predicated region
        $region45: #{tpu_custom_call.1} parent=39 // pred_check
          %p267 = pneg %p74
        $region46: #{tpu_custom_call.1} parent=39 // pred_check_branch
          %269 = sbr.rel (%p267) target = $region48
        $region47: #{tpu_custom_call.1} parent=39 // pred_region
          %270 = dma.done [#allocation6], 16
        $region48: #{tpu_custom_call.1} parent=39 // pred_fallthru
          _
        // Predicated region
        $region49: #{tpu_custom_call.1} parent=39 // pred_check
          %p271 = pneg %p95
        $region50: #{tpu_custom_call.1} parent=39 // pred_check_branch
          %273 = sbr.rel (%p271) target = $region52
        $region51: #{tpu_custom_call.1} parent=39 // pred_region
          %274 = dma.done [#allocation9], 16
        $region52: #{tpu_custom_call.1} parent=39 // pred_fallthru
          _
        // Predicated region
        $region53: #{tpu_custom_call.1} parent=39 // pred_check
          %p275 = pneg %p116
        $region54: #{tpu_custom_call.1} parent=39 // pred_check_branch
          %277 = sbr.rel (%p275) target = $region56
        $region55: #{tpu_custom_call.1} parent=39 // pred_region
          %278 = dma.done [#allocation9], 16
        $region56: #{tpu_custom_call.1} parent=39 // pred_fallthru
          _
        %s279 = sand.u32 %s131, 1
        %s280 = scalar_lea.sflag [#allocation3], %s279
        %s281 = sand.u32 %s131, 1
        %s282 = smul.addr %s281, 96
        %s283 = scalar_lea.vmem [#allocation11], %s282
        // Predicated region
        $region57: #{tpu_custom_call.1} parent=39 // pred_check
          %p284 = pneg %p144
        $region58: #{tpu_custom_call.1} parent=39 // pred_check_branch
          %286 = sbr.rel (%p284) target = $region60
        $region59: #{tpu_custom_call.1} parent=39 // pred_region
          %287 = dma.done %s280, 1536
        $region60: #{tpu_custom_call.1} parent=39 // pred_fallthru
          _
        %288 = sfence
        %p289 = pneg %p53
        %p290 = pneg %p50
        %p291 = pneg %p74
        %p292 = pneg %p71
        %p293 = pneg %p95
        %p294 = pneg %p92
        %p295 = pneg %p116
        %p296 = pneg %p113
        %s297 = sand.u32 %s131, 1
        %s298 = scalar_lea.sflag [#allocation3], %s297
        %s299 = sand.u32 %s131, 1
        %s300 = smul.addr %s299, 96
        %s301 = scalar_lea.vmem [#allocation11], %s300
        %p302 = pneg %p144
        %p303 = pneg %p141
        %p304 = pneg %p172
        %p305 = pneg %p169
        %s306 = sand.u32 %s159, 1
        %s307 = scalar_lea.sflag [#allocation4], %s306
        %s308 = sand.u32 %s159, 1
        %s309 = smul.addr %s308, 96
        %s310 = scalar_lea.vmem [#allocation12], %s309
        %s311 = smul.u32 4, %s30
        %s312 = smul.u32 4, %s30
        %s313 = sld [smem:[#allocation2 + %s29]]
        %s314 = sld [smem:[#allocation7 + %s29]]
        %s315 = smul.u32 %s30, 32
        %s316 = sadd.s32 %s315, 32
        %p317 = scmp.le.s32.totalorder %s316, %s313
        %p318 = scmp.ge.s32.totalorder %s314, 128
        %p319 = pnand %p317, %p318
        %p320 = pneg %p319
        // Predicated region
        $region61: #{tpu_custom_call.1} parent=39 // pred_check
          _
        $region62: #{tpu_custom_call.1} parent=39 // pred_check_branch
          %322 = sbr.rel (%p319) target = $region64
        $region63: #{tpu_custom_call.1} parent=39 // pred_region
          %v323 = vld [vmem:[%s283] sm:$0xff]
          %v324 = vld [vmem:[%s283 + $0x8] sm:$0xff]
          %v325 = vld [vmem:[%s283 + $0x10] sm:$0xff]
          %v326 = vld [vmem:[%s283 + $0x18] sm:$0xff]
          %s327 = sld [smem:[#allocation8]]
          %v328 = vstv %s327
          %v329 = vmul.f32 %v323, %v328
          %v330 = vmul.f32 %v324, %v328
          %v331 = vmul.f32 %v325, %v328
          %v332 = vmul.f32 %v326, %v328
          %s333 = sld [smem:[#allocation10]]
          %v334 = vstv %s333
          %v335 = vadd.f32 %v329, %v334
          %v336 = vadd.f32 %v330, %v334
          %v337 = vadd.f32 %v331, %v334
          %v338 = vadd.f32 %v332, %v334
          %339 = vst [vmem:[%s310] sm:$0xff] %v335
          %340 = vst [vmem:[%s310 + $0x8] sm:$0xff] %v336
          %341 = vst [vmem:[%s310 + $0x10] sm:$0xff] %v337
          %342 = vst [vmem:[%s310 + $0x18] sm:$0xff] %v338
          %s343 = scalar_lea.vmem %s283, 32 [#allocation11]
          %v344 = vld [vmem:[%s343] sm:$0xff]
          %v345 = vld [vmem:[%s343 + $0x8] sm:$0xff]
          %v346 = vld [vmem:[%s343 + $0x10] sm:$0xff]
          %v347 = vld [vmem:[%s343 + $0x18] sm:$0xff]
          %s348 = sld [smem:[#allocation8 + $0x1]]
          %v349 = vstv %s348
          %v350 = vmul.f32 %v344, %v349
          %v351 = vmul.f32 %v345, %v349
          %v352 = vmul.f32 %v346, %v349
          %v353 = vmul.f32 %v347, %v349
          %s354 = sld [smem:[#allocation10 + $0x1]]
          %v355 = vstv %s354
          %v356 = vadd.f32 %v350, %v355
          %v357 = vadd.f32 %v351, %v355
          %v358 = vadd.f32 %v352, %v355
          %v359 = vadd.f32 %v353, %v355
          %s360 = scalar_lea.vmem %s310, 32 [#allocation12]
          %361 = vst [vmem:[%s360] sm:$0xff] %v356
          %362 = vst [vmem:[%s360 + $0x8] sm:$0xff] %v357
          %363 = vst [vmem:[%s360 + $0x10] sm:$0xff] %v358
          %364 = vst [vmem:[%s360 + $0x18] sm:$0xff] %v359
          %s365 = scalar_lea.vmem %s283, 64 [#allocation11]
          %v366 = vld [vmem:[%s365] sm:$0xff]
          %v367 = vld [vmem:[%s365 + $0x8] sm:$0xff]
          %v368 = vld [vmem:[%s365 + $0x10] sm:$0xff]
          %v369 = vld [vmem:[%s365 + $0x18] sm:$0xff]
          %s370 = sld [smem:[#allocation8 + $0x2]]
          %v371 = vstv %s370
          %v372 = vmul.f32 %v366, %v371
          %v373 = vmul.f32 %v367, %v371
          %v374 = vmul.f32 %v368, %v371
          %v375 = vmul.f32 %v369, %v371
          %s376 = sld [smem:[#allocation10 + $0x2]]
          %v377 = vstv %s376
          %v378 = vadd.f32 %v372, %v377
          %v379 = vadd.f32 %v373, %v377
          %v380 = vadd.f32 %v374, %v377
          %v381 = vadd.f32 %v375, %v377
          %s382 = scalar_lea.vmem %s310, 64 [#allocation12]
          %383 = vst [vmem:[%s382] sm:$0xff] %v378
          %384 = vst [vmem:[%s382 + $0x8] sm:$0xff] %v379
          %385 = vst [vmem:[%s382 + $0x10] sm:$0xff] %v380
          %386 = vst [vmem:[%s382 + $0x18] sm:$0xff] %v381
        $region64: #{tpu_custom_call.1} parent=39 // pred_fallthru
          _
        %p387 = pneg %p320
        // Predicated region
        $region65: #{tpu_custom_call.1} parent=39 // pred_check
          _
        $region66: #{tpu_custom_call.1} parent=39 // pred_check_branch
          %389 = sbr.rel (%p320) target = $region68
        $region67: #{tpu_custom_call.1} parent=39 // pred_region
          %v390 = vlaneseq
          %v391 = vshrl.u32 %v390, 7
          %v392 = vadd.s32 %v391, 8
          %v393 = vadd.s32 %v391, 16
          %v394 = vadd.s32 %v391, 24
          %v395 = vstv %s315
          %v396 = vadd.s32 %v391, %v395
          %v397 = vadd.s32 %v392, %v395
          %v398 = vadd.s32 %v393, %v395
          %v399 = vadd.s32 %v394, %v395
          %v400 = vlaneseq
          %v401 = vand.u32 %v400, 127
          %v402 = vstv %s313
          %vm403 = vcmp.lt.s32.totalorder %v396, %v402
          %vm404 = vcmp.lt.s32.totalorder %v397, %v402
          %vm405 = vcmp.lt.s32.totalorder %v398, %v402
          %vm406 = vcmp.lt.s32.totalorder %v399, %v402
          %v407 = vstv %s314
          %vm408 = vcmp.lt.s32.totalorder %v401, %v407
          %vm409 = vmand %vm403, %vm408
          %vm410 = vmand %vm404, %vm408
          %vm411 = vmand %vm405, %vm408
          %vm412 = vmand %vm406, %vm408
          %v413 = vld [vmem:[%s283] sm:$0xff]
          %v414 = vld [vmem:[%s283 + $0x8] sm:$0xff]
          %v415 = vld [vmem:[%s283 + $0x10] sm:$0xff]
          %v416 = vld [vmem:[%s283 + $0x18] sm:$0xff]
          %s417 = sld [smem:[#allocation8]]
          %v418 = vstv %s417
          %v419 = vmul.f32 %v413, %v418
          %v420 = vmul.f32 %v414, %v418
          %v421 = vmul.f32 %v415, %v418
          %v422 = vmul.f32 %v416, %v418
          %s423 = sld [smem:[#allocation10]]
          %v424 = vstv %s423
          %v425 = vadd.f32 %v419, %v424
          %v426 = vadd.f32 %v420, %v424
          %v427 = vadd.f32 %v421, %v424
          %v428 = vadd.f32 %v422, %v424
          %v429 = vsel %vm409, %v425, 0.0
          %v430 = vsel %vm410, %v426, 0.0
          %v431 = vsel %vm411, %v427, 0.0
          %v432 = vsel %vm412, %v428, 0.0
          %433 = vst [vmem:[%s310] sm:$0xff] %v429
          %434 = vst [vmem:[%s310 + $0x8] sm:$0xff] %v430
          %435 = vst [vmem:[%s310 + $0x10] sm:$0xff] %v431
          %436 = vst [vmem:[%s310 + $0x18] sm:$0xff] %v432
          %s437 = scalar_lea.vmem %s283, 32 [#allocation11]
          %v438 = vld [vmem:[%s437] sm:$0xff]
          %v439 = vld [vmem:[%s437 + $0x8] sm:$0xff]
          %v440 = vld [vmem:[%s437 + $0x10] sm:$0xff]
          %v441 = vld [vmem:[%s437 + $0x18] sm:$0xff]
          %s442 = sld [smem:[#allocation8 + $0x1]]
          %v443 = vstv %s442
          %v444 = vmul.f32 %v438, %v443
          %v445 = vmul.f32 %v439, %v443
          %v446 = vmul.f32 %v440, %v443
          %v447 = vmul.f32 %v441, %v443
          %s448 = sld [smem:[#allocation10 + $0x1]]
          %v449 = vstv %s448
          %v450 = vadd.f32 %v444, %v449
          %v451 = vadd.f32 %v445, %v449
          %v452 = vadd.f32 %v446, %v449
          %v453 = vadd.f32 %v447, %v449
          %v454 = vsel %vm409, %v450, 0.0
          %v455 = vsel %vm410, %v451, 0.0
          %v456 = vsel %vm411, %v452, 0.0
          %v457 = vsel %vm412, %v453, 0.0
          %s458 = scalar_lea.vmem %s310, 32 [#allocation12]
          %459 = vst [vmem:[%s458] sm:$0xff] %v454
          %460 = vst [vmem:[%s458 + $0x8] sm:$0xff] %v455
          %461 = vst [vmem:[%s458 + $0x10] sm:$0xff] %v456
          %462 = vst [vmem:[%s458 + $0x18] sm:$0xff] %v457
          %s463 = scalar_lea.vmem %s283, 64 [#allocation11]
          %v464 = vld [vmem:[%s463] sm:$0xff]
          %v465 = vld [vmem:[%s463 + $0x8] sm:$0xff]
          %v466 = vld [vmem:[%s463 + $0x10] sm:$0xff]
          %v467 = vld [vmem:[%s463 + $0x18] sm:$0xff]
          %s468 = sld [smem:[#allocation8 + $0x2]]
          %v469 = vstv %s468
          %v470 = vmul.f32 %v464, %v469
          %v471 = vmul.f32 %v465, %v469
          %v472 = vmul.f32 %v466, %v469
          %v473 = vmul.f32 %v467, %v469
          %s474 = sld [smem:[#allocation10 + $0x2]]
          %v475 = vstv %s474
          %v476 = vadd.f32 %v470, %v475
          %v477 = vadd.f32 %v471, %v475
          %v478 = vadd.f32 %v472, %v475
          %v479 = vadd.f32 %v473, %v475
          %v480 = vsel %vm409, %v476, 0.0
          %v481 = vsel %vm410, %v477, 0.0
          %v482 = vsel %vm411, %v478, 0.0
          %v483 = vsel %vm412, %v479, 0.0
          %s484 = scalar_lea.vmem %s310, 64 [#allocation12]
          %485 = vst [vmem:[%s484] sm:$0xff] %v480
          %486 = vst [vmem:[%s484 + $0x8] sm:$0xff] %v481
          %487 = vst [vmem:[%s484 + $0x10] sm:$0xff] %v482
          %488 = vst [vmem:[%s484 + $0x18] sm:$0xff] %v483
        $region68: #{tpu_custom_call.1} parent=39 // pred_fallthru
          _
        %s489 = sand.u32 %s159, 1
        %s490 = scalar_lea.sflag [#allocation4], %s489
        %s491 = sand.u32 %s159, 1
        %s492 = smul.addr %s491, 96
        %s493 = scalar_lea.vmem [#allocation12], %s492
        // Predicated region
        $region69: #{tpu_custom_call.1} parent=39 // pred_check
          %p494 = pneg %p169
        $region70: #{tpu_custom_call.1} parent=39 // pred_check_branch
          %496 = sbr.rel (%p494) target = $region72
        $region71: #{tpu_custom_call.1} parent=39 // pred_region
          %s497 = smul.u32 4, %s30
          %s499 = ssub.s32 1536, 1536
          %500 = vsyncadd %s490, %s499
          %s501 = smul.addr %s29, 12
          %s502 = sadd.s32 %s497, %s501
          %s503 = smul.addr %s502, 128
          %s504 = scalar_lea.hbm %s5, %s503
          %s505 = sshll.u32 %s493, 4
          %s506 = int_to_ptr.vmem [resolvable:$true] %s505
          %511 = dma.vmem_to_hbm [thread:$0]  %s506, 1536, %s504, %s490, 128, 128, 8
        $region72: #{tpu_custom_call.1} parent=39 // pred_fallthru
          _
      $region40: #{tpu_custom_call.1} parent=5 // pred_fallthru
        _
      %p512 = scmp.le.s32.totalorder 2, %s20
      // Predicated region
      $region73: #{tpu_custom_call.1} parent=5 // pred_check
        %p513 = pneg %p512
      $region74: #{tpu_custom_call.1} parent=5 // pred_check_branch
        %515 = sbr.rel (%p513) target = $region76
      $region75: #{tpu_custom_call.1} parent=5 // pred_region
        %s516 = ssub.s32 %s20, 2
        // Predicated region
        $region77: #{tpu_custom_call.1} parent=75 // pred_check
          %p517 = pneg %p175
        $region78: #{tpu_custom_call.1} parent=75 // pred_check_branch
          %519 = sbr.rel (%p517) target = $region80
        $region79: #{tpu_custom_call.1} parent=75 // pred_region
          %s520 = sand.u32 %s160, 1
          %s521 = scalar_lea.sflag [#allocation4], %s520
          %s522 = sand.u32 %s160, 1
          %s523 = smul.addr %s522, 96
          %s524 = scalar_lea.vmem [#allocation12], %s523
          %525 = dma.done %s521, 1536
        $region80: #{tpu_custom_call.1} parent=75 // pred_fallthru
          _
      $region76: #{tpu_custom_call.1} parent=5 // pred_fallthru
        _
    $region6: #{tpu_custom_call.1} parent=1 // loop_footer
      %s24 = sadd.s32 1, %s20
    $region7: #{tpu_custom_call.1} parent=1 // loop_footer_branch
      %19 = sbr.rel target = $region3
    $region8: #{tpu_custom_call.1} parent=1 // loop_exit
      _
    %526 = vsyncpa [#allocation3], 1
    %s527 = scalar_lea.sflag [#allocation3], 1
    %528 = vsyncpa %s527, 1
    %529 = vsyncpa [#allocation4], 1
    %s530 = scalar_lea.sflag [#allocation4], 1
    %531 = vsyncpa %s530, 1
    %532 = vsyncpa [#allocation5], 1
    %s533 = scalar_lea.sflag [#allocation5], 1
    %534 = vsyncpa %s533, 1
    %535 = vsyncpa [#allocation6], 1
    %s536 = scalar_lea.sflag [#allocation6], 1
    %537 = vsyncpa %s536, 1
    %538 = vsyncpa [#allocation9], 1

</llo_original>
